<compile_context>
chip_gen: v6e
topology: v6e:2x2x1
jax: 0.10.0
libtpu: 0.0.40
codegen_flags: <defaults>
</compile_context>

<pallas_src>
import functools

import jax
import jax.numpy as jnp
from jax import lax
from jax.experimental import pallas as pl
from jax.experimental.pallas import tpu as pltpu


def _uncer_head_kernel(w_ref, b_ref, x_ref, o_ref, taps_ref, *, H, W):
    # w_ref:    (1, 16, Cc) taps-major weights for this channel chunk (VMEM).
    #           Row t = 3*kh + kw of the 3x3 window; rows 9..15 are zero padding.
    # b_ref:    (1, 1)   float32 bias (SMEM scalar).
    # x_ref:    (1, Cc, HW) lane-dense input chunk for one batch element (VMEM).
    # o_ref:    (1, 1, HW)  lane-dense output (VMEM).
    # taps_ref: (16, HW) float32 scratch accumulating per-tap channel sums.
    c_step = pl.program_id(1)
    c_last = pl.num_programs(1) - 1
    HW = o_ref.shape[2]

    @pl.when(c_step == 0)
    def _init():
        taps_ref[...] = jnp.zeros_like(taps_ref)

    # Channel reduction on the MXU: (16, Cc) @ (Cc, HW) -> (16, HW) tap partial sums.
    taps_ref[...] += jnp.dot(w_ref[0], x_ref[0], preferred_element_type=jnp.float32)

    @pl.when(c_step == c_last)
    def _finalize():
        taps = taps_ref[...]                                   # (16, HW) f32

        # In-register halo masks (no coords input, no per-channel work).
        pos = lax.broadcasted_iota(jnp.int32, (1, HW), 1)      # flat index h*W + w
        # ww = pos % W via float-reciprocal estimate + exact integer correction
        # (vector integer div/rem is avoided on purpose).
        q = (pos.astype(jnp.float32) * (1.0 / W)).astype(jnp.int32)
        ww = pos - q * W
        ww = jnp.where(ww < 0, ww + W, ww)
        ww = jnp.where(ww >= W, ww - W, ww)

        h_ok = {-1: pos >= W, 0: None, 1: pos < (H - 1) * W}
        w_ok = {-1: ww >= 1, 0: None, 1: ww <= W - 2}

        acc = jnp.full((1, HW), b_ref[0, 0], dtype=jnp.float32)
        for dh in (-1, 0, 1):
            for dw in (-1, 0, 1):
                t = (dh + 1) * 3 + (dw + 1)
                s = taps[t:t + 1, :]                           # (1, HW)
                off = dh * W + dw                              # flat tap offset
                if off != 0:
                    # shifted[p] = taps[t, p + off]; wrapped halo masked below.
                    s = pltpu.roll(s, (-off) % HW, axis=1)
                hv, wv = h_ok[dh], w_ok[dw]
                if hv is None and wv is None:
                    acc = acc + s
                else:
                    m = hv if wv is None else (wv if hv is None else jnp.logical_and(hv, wv))
                    acc = acc + jnp.where(m, s, 0.0)

        o_ref[0] = jax.nn.sigmoid(acc).astype(o_ref.dtype)


def _pick_channel_chunk(C, HW, itemsize, budget_bytes=8 << 20):
    """Largest channel chunk that keeps the x block under budget.

    The chunk must be a multiple of 8 (sublane rule for the x BlockSpec) that
    divides C, otherwise we fall back to the full C (single chunk).
    """
    if C * HW * itemsize <= budget_bytes:
        return C
    cands = [k for k in range(8, C, 8)
             if C % k == 0 and k * HW * itemsize <= budget_bytes]
    return max(cands) if cands else C


def _vmem_limit_bytes():
    # ~75% of physical VMEM (v5e/v6e: 128 MiB -> 96 MiB, v7x: 64 MiB -> 48 MiB),
    # capped at 100 MiB; safe 48 MiB fallback if the hardware query is unavailable.
    try:
        cap = pltpu.get_tpu_info().vmem_capacity_bytes
    except Exception:
        cap = 64 * 1024 * 1024
    return int(min(cap * 3 // 4, 100 * 1024 * 1024))


def uncer_head_forward(x, weight, bias, *, c_chunk=None):
    """x: (N, C, H, W); weight: (1, C, 3, 3); bias: (1,). Returns (N, 1, H, W)."""
    N, C, H, W = x.shape
    HW = H * W

    x_flat = x.reshape(N, C, HW)                               # row-major: free reshape

    # Taps-major weights: w_taps[t, c] = weight[0, c, kh, kw] with t = 3*kh + kw,
    # zero-padded to 16 tap rows for sublane alignment of the MXU operand.
    w_taps = jnp.transpose(weight.reshape(C, 9), (1, 0)).astype(x.dtype)   # (9, C)
    w_taps16 = jnp.zeros((16, C), dtype=x.dtype).at[:9, :].set(w_taps)     # (16, C)

    if c_chunk is None:
        c_chunk = _pick_channel_chunk(C, HW, x.dtype.itemsize)
    if C % c_chunk != 0 or (c_chunk != C and c_chunk % 8 != 0):
        c_chunk = C
    n_chunks = C // c_chunk
    # (n_chunks, 16, c_chunk): chunk g holds channels [g*c_chunk, (g+1)*c_chunk).
    w_blocks = w_taps16.reshape(16, n_chunks, c_chunk).transpose(1, 0, 2)

    b_arr = bias.astype(jnp.float32).reshape(1, 1)

    kernel = functools.partial(_uncer_head_kernel, H=H, W=W)

    out_flat = pl.pallas_call(
        kernel,
        out_shape=jax.ShapeDtypeStruct((N, 1, HW), x.dtype),
        grid=(N, n_chunks),
        in_specs=[
            pl.BlockSpec((1, 16, c_chunk), lambda n, c: (c, 0, 0)),
            pl.BlockSpec((1, 1), lambda n, c: (0, 0),
                         memory_space=pltpu.MemorySpace.SMEM),
            pl.BlockSpec((1, c_chunk, HW), lambda n, c: (n, c, 0)),
        ],
        out_specs=pl.BlockSpec((1, 1, HW), lambda n, c: (n, 0, 0)),
        scratch_shapes=[pltpu.VMEM((16, HW), jnp.float32)],
        compiler_params=pltpu.CompilerParams(
            dimension_semantics=("parallel", "arbitrary"),
            vmem_limit_bytes=_vmem_limit_bytes(),
        ),
    )(w_blocks, b_arr, x_flat)

    return out_flat.reshape(N, 1, H, W)


if __name__ == "__main__":
    # Small, module-consistent shapes; C=16 with c_chunk=8 exercises the
    # two-step channel-reduction (accumulator) path.
    N, C, H, W = 2, 16, 16, 16

    key = jax.random.PRNGKey(0)
    kx, kw, kb = jax.random.split(key, 3)

    x = jax.random.normal(kx, (N, C, H, W), dtype=jnp.float32)
    # Conv2d(C, 1, 3) parameter shapes with PyTorch-style uniform init bounds.
    fan_in = C * 3 * 3
    bound = 1.0 / (fan_in ** 0.5)
    weight = jax.random.uniform(kw, (1, C, 3, 3), jnp.float32, -bound, bound)
    bias = jax.random.uniform(kb, (1,), jnp.float32, -bound, bound)

    out = uncer_head_forward(x, weight, bias, c_chunk=8)
    out = jax.block_until_ready(out)

    # Reference check against XLA conv (NCHW, OIHW).  Tolerance allows for the
    # MXU's f32 pass decomposition differing slightly from the XLA conv path.
    ref = jax.nn.sigmoid(
        lax.conv_general_dilated(
            x, weight, window_strides=(1, 1), padding=((1, 1), (1, 1)),
            dimension_numbers=("NCHW", "OIHW", "NCHW"))
        + bias.reshape(1, 1, 1, 1))
    assert out.shape == (N, 1, H, W)
    assert jnp.allclose(out, ref, atol=2e-3, rtol=2e-3)

    print("KERNEL_OK")
</pallas_src>

<mosaic_0001>
module attributes {stable_mosaic.version = 11 : i64} {
  func.func @_uncer_head_kernel(%arg0: i32, %arg1: i32, %arg2: memref<1x16x8xf32, #tpu.memory_space<vmem>>, %arg3: memref<1x1xf32, #tpu.memory_space<smem>>, %arg4: memref<1x8x256xf32, #tpu.memory_space<vmem>>, %arg5: memref<1x1x256xf32, #tpu.memory_space<vmem>>, %arg6: memref<16x256xf32, #tpu.memory_space<vmem>>) attributes {dimension_semantics = [#tpu.dimension_semantics<parallel>, #tpu.dimension_semantics<arbitrary>], iteration_bounds = array<i64: 2, 2>, scalar_prefetch = 0 : i64, scratch_operands = 1 : i64, tpu.core_type = #tpu.core_type<tc>, window_params = [{transform_indices = @transform_0, window_bounds = array<i64: 1, 16, 8>}, {transform_indices = @transform_1, window_bounds = array<i64: 1, 1>}, {transform_indices = @transform_2, window_bounds = array<i64: 1, 8, 256>}, {transform_indices = @transform_3, window_bounds = array<i64: 1, 1, 256>}]} {
    %c0_i32 = arith.constant 0 : i32
    %0 = arith.cmpi eq, %arg1, %c0_i32 : i32
    %1 = arith.extui %0 : i1 to i32
    %c0_i32_0 = arith.constant 0 : i32
    %2 = arith.cmpi ne, %1, %c0_i32_0 : i32
    scf.if %2 {
      %cst_11 = arith.constant 0.000000e+00 : f32
      %14 = vector.broadcast %cst_11 : f32 to vector<16x256xf32>
      %c0_12 = arith.constant 0 : index
      %c0_13 = arith.constant 0 : index
      %15 = vector.load %arg6[%c0_12, %c0_13] : memref<16x256xf32, #tpu.memory_space<vmem>>, vector<16x256xf32>
      tpu.vector_store %arg6[%c0_12, %c0_13], %14 {strides = array<i32>} : memref<16x256xf32, #tpu.memory_space<vmem>>, vector<16x256xf32>,
    } else {
    }
    %c0 = arith.constant 0 : index
    %c0_1 = arith.constant 0 : index
    %3 = vector.load %arg6[%c0, %c0_1] : memref<16x256xf32, #tpu.memory_space<vmem>>, vector<16x256xf32>
    %c0_2 = arith.constant 0 : index
    %c0_3 = arith.constant 0 : index
    %c0_4 = arith.constant 0 : index
    %4 = vector.load %arg2[%c0_2, %c0_3, %c0_4] : memref<1x16x8xf32, #tpu.memory_space<vmem>>, vector<1x16x8xf32>
    %5 = vector.shape_cast %4 : vector<1x16x8xf32> to vector<16x8xf32>
    %c0_5 = arith.constant 0 : index
    %c0_6 = arith.constant 0 : index
    %c0_7 = arith.constant 0 : index
    %6 = vector.load %arg4[%c0_5, %c0_6, %c0_7] : memref<1x8x256xf32, #tpu.memory_space<vmem>>, vector<1x8x256xf32>
    %7 = vector.shape_cast %6 : vector<1x8x256xf32> to vector<8x256xf32>
    %cst = arith.constant dense<0.000000e+00> : vector<16x256xf32>
    %8 = tpu.matmul %5, %7, %cst {dimension_numbers = #tpu.dot_dimension_numbers<[1], [0], [0], [1], [0, 0, 1, 1], [], []>} : vector<16x8xf32>, vector<8x256xf32>, vector<16x256xf32> -> vector<16x256xf32>
    %9 = arith.addf %3, %8 : vector<16x256xf32>
    %c0_8 = arith.constant 0 : index
    %c0_9 = arith.constant 0 : index
    %10 = vector.load %arg6[%c0_8, %c0_9] : memref<16x256xf32, #tpu.memory_space<vmem>>, vector<16x256xf32>
    tpu.vector_store %arg6[%c0_8, %c0_9], %9 {strides = array<i32>} : memref<16x256xf32, #tpu.memory_space<vmem>>, vector<16x256xf32>,
    %c1_i32 = arith.constant 1 : i32
    %11 = arith.cmpi eq, %arg1, %c1_i32 : i32
    %12 = arith.extui %11 : i1 to i32
    %c0_i32_10 = arith.constant 0 : i32
    %13 = arith.cmpi ne, %12, %c0_i32_10 : i32
    scf.if %13 {
      %c0_11 = arith.constant 0 : index
      %c0_12 = arith.constant 0 : index
      %14 = vector.load %arg6[%c0_11, %c0_12] : memref<16x256xf32, #tpu.memory_space<vmem>>, vector<16x256xf32>
      %15 = tpu.iota {dimensions = array<i32: 1>} : vector<1x256xi32>
      %16 = arith.sitofp %15 : vector<1x256xi32> to vector<1x256xf32>
      %cst_13 = arith.constant 6.250000e-02 : f32
      %17 = vector.broadcast %cst_13 : f32 to vector<1x256xf32>
      %18 = arith.mulf %16, %17 : vector<1x256xf32>
      %19 = arith.fptosi %18 : vector<1x256xf32> to vector<1x256xi32>
      %c16_i32 = arith.constant 16 : i32
      %20 = vector.broadcast %c16_i32 : i32 to vector<1x256xi32>
      %21 = arith.muli %19, %20 : vector<1x256xi32>
      %22 = arith.subi %15, %21 : vector<1x256xi32>
      %c0_i32_14 = arith.constant 0 : i32
      %23 = vector.broadcast %c0_i32_14 : i32 to vector<1x256xi32>
      %24 = arith.cmpi slt, %22, %23 : vector<1x256xi32>
      %c16_i32_15 = arith.constant 16 : i32
      %25 = vector.broadcast %c16_i32_15 : i32 to vector<1x256xi32>
      %26 = arith.addi %22, %25 : vector<1x256xi32>
      %27 = arith.select %24, %26, %22 : vector<1x256xi1>, vector<1x256xi32>
      %c16_i32_16 = arith.constant 16 : i32
      %28 = vector.broadcast %c16_i32_16 : i32 to vector<1x256xi32>
      %29 = arith.cmpi sge, %27, %28 : vector<1x256xi32>
      %c16_i32_17 = arith.constant 16 : i32
      %30 = vector.broadcast %c16_i32_17 : i32 to vector<1x256xi32>
      %31 = arith.subi %27, %30 : vector<1x256xi32>
      %32 = arith.select %29, %31, %27 : vector<1x256xi1>, vector<1x256xi32>
      %c16_i32_18 = arith.constant 16 : i32
      %33 = vector.broadcast %c16_i32_18 : i32 to vector<1x256xi32>
      %34 = arith.cmpi sge, %15, %33 : vector<1x256xi32>
      %c240_i32 = arith.constant 240 : i32
      %35 = vector.broadcast %c240_i32 : i32 to vector<1x256xi32>
      %36 = arith.cmpi slt, %15, %35 : vector<1x256xi32>
      %c1_i32_19 = arith.constant 1 : i32
      %37 = vector.broadcast %c1_i32_19 : i32 to vector<1x256xi32>
      %38 = arith.cmpi sge, %32, %37 : vector<1x256xi32>
      %c14_i32 = arith.constant 14 : i32
      %39 = vector.broadcast %c14_i32 : i32 to vector<1x256xi32>
      %40 = arith.cmpi sle, %32, %39 : vector<1x256xi32>
      %c0_20 = arith.constant 0 : index
      %c0_21 = arith.constant 0 : index
      %41 = memref.load %arg3[%c0_20, %c0_21] : memref<1x1xf32, #tpu.memory_space<smem>>
      %42 = vector.broadcast %41 : f32 to vector<1x256xf32>
      %43 = vector.extract_strided_slice %14 {offsets = [0, 0], sizes = [1, 256], strides = [1, 1]} : vector<16x256xf32> to vector<1x256xf32>
      %c17_i32 = arith.constant 17 : i32
      %44 = tpu.dynamic_rotate %43 by %c17_i32 dim 1 : vector<1x256xf32>, i32 -> vector<1x256xf32>
      %45 = arith.andi %34, %38 : vector<1x256xi1>
      %cst_22 = arith.constant 0.000000e+00 : f32
      %46 = vector.broadcast %cst_22 : f32 to vector<1x256xf32>
      %47 = arith.select %45, %44, %46 : vector<1x256xi1>, vector<1x256xf32>
      %48 = arith.addf %42, %47 : vector<1x256xf32>
      %49 = vector.extract_strided_slice %14 {offsets = [1, 0], sizes = [1, 256], strides = [1, 1]} : vector<16x256xf32> to vector<1x256xf32>
      %c16_i32_23 = arith.constant 16 : i32
      %50 = tpu.dynamic_rotate %49 by %c16_i32_23 dim 1 : vector<1x256xf32>, i32 -> vector<1x256xf32>
      %cst_24 = arith.constant 0.000000e+00 : f32
      %51 = vector.broadcast %cst_24 : f32 to vector<1x256xf32>
      %52 = arith.select %34, %50, %51 : vector<1x256xi1>, vector<1x256xf32>
      %53 = arith.addf %48, %52 : vector<1x256xf32>
      %54 = vector.extract_strided_slice %14 {offsets = [2, 0], sizes = [1, 256], strides = [1, 1]} : vector<16x256xf32> to vector<1x256xf32>
      %c15_i32 = arith.constant 15 : i32
      %55 = tpu.dynamic_rotate %54 by %c15_i32 dim 1 : vector<1x256xf32>, i32 -> vector<1x256xf32>
      %56 = arith.andi %34, %40 : vector<1x256xi1>
      %cst_25 = arith.constant 0.000000e+00 : f32
      %57 = vector.broadcast %cst_25 : f32 to vector<1x256xf32>
      %58 = arith.select %56, %55, %57 : vector<1x256xi1>, vector<1x256xf32>
      %59 = arith.addf %53, %58 : vector<1x256xf32>
      %60 = vector.extract_strided_slice %14 {offsets = [3, 0], sizes = [1, 256], strides = [1, 1]} : vector<16x256xf32> to vector<1x256xf32>
      %c1_i32_26 = arith.constant 1 : i32
      %61 = tpu.dynamic_rotate %60 by %c1_i32_26 dim 1 : vector<1x256xf32>, i32 -> vector<1x256xf32>
      %cst_27 = arith.constant 0.000000e+00 : f32
      %62 = vector.broadcast %cst_27 : f32 to vector<1x256xf32>
      %63 = arith.select %38, %61, %62 : vector<1x256xi1>, vector<1x256xf32>
      %64 = arith.addf %59, %63 : vector<1x256xf32>
      %65 = vector.extract_strided_slice %14 {offsets = [4, 0], sizes = [1, 256], strides = [1, 1]} : vector<16x256xf32> to vector<1x256xf32>
      %66 = arith.addf %64, %65 : vector<1x256xf32>
      %67 = vector.extract_strided_slice %14 {offsets = [5, 0], sizes = [1, 256], strides = [1, 1]} : vector<16x256xf32> to vector<1x256xf32>
      %c255_i32 = arith.constant 255 : i32
      %68 = tpu.dynamic_rotate %67 by %c255_i32 dim 1 : vector<1x256xf32>, i32 -> vector<1x256xf32>
      %cst_28 = arith.constant 0.000000e+00 : f32
      %69 = vector.broadcast %cst_28 : f32 to vector<1x256xf32>
      %70 = arith.select %40, %68, %69 : vector<1x256xi1>, vector<1x256xf32>
      %71 = arith.addf %66, %70 : vector<1x256xf32>
      %72 = vector.extract_strided_slice %14 {offsets = [6, 0], sizes = [1, 256], strides = [1, 1]} : vector<16x256xf32> to vector<1x256xf32>
      %c241_i32 = arith.constant 241 : i32
      %73 = tpu.dynamic_rotate %72 by %c241_i32 dim 1 : vector<1x256xf32>, i32 -> vector<1x256xf32>
      %74 = arith.andi %36, %38 : vector<1x256xi1>
      %cst_29 = arith.constant 0.000000e+00 : f32
      %75 = vector.broadcast %cst_29 : f32 to vector<1x256xf32>
      %76 = arith.select %74, %73, %75 : vector<1x256xi1>, vector<1x256xf32>
      %77 = arith.addf %71, %76 : vector<1x256xf32>
      %78 = vector.extract_strided_slice %14 {offsets = [7, 0], sizes = [1, 256], strides = [1, 1]} : vector<16x256xf32> to vector<1x256xf32>
      %c240_i32_30 = arith.constant 240 : i32
      %79 = tpu.dynamic_rotate %78 by %c240_i32_30 dim 1 : vector<1x256xf32>, i32 -> vector<1x256xf32>
      %cst_31 = arith.constant 0.000000e+00 : f32
      %80 = vector.broadcast %cst_31 : f32 to vector<1x256xf32>
      %81 = arith.select %36, %79, %80 : vector<1x256xi1>, vector<1x256xf32>
      %82 = arith.addf %77, %81 : vector<1x256xf32>
      %83 = vector.extract_strided_slice %14 {offsets = [8, 0], sizes = [1, 256], strides = [1, 1]} : vector<16x256xf32> to vector<1x256xf32>
      %c239_i32 = arith.constant 239 : i32
      %84 = tpu.dynamic_rotate %83 by %c239_i32 dim 1 : vector<1x256xf32>, i32 -> vector<1x256xf32>
      %85 = arith.andi %36, %40 : vector<1x256xi1>
      %cst_32 = arith.constant 0.000000e+00 : f32
      %86 = vector.broadcast %cst_32 : f32 to vector<1x256xf32>
      %87 = arith.select %85, %84, %86 : vector<1x256xi1>, vector<1x256xf32>
      %88 = arith.addf %82, %87 : vector<1x256xf32>
      %89 = arith.negf %88 : vector<1x256xf32>
      %90 = math.exp %89 : vector<1x256xf32>
      %cst_33 = arith.constant 1.000000e+00 : f32
      %91 = vector.broadcast %cst_33 : f32 to vector<1x256xf32>
      %92 = arith.addf %91, %90 : vector<1x256xf32>
      %93 = arith.divf %91, %92 : vector<1x256xf32>
      %c0_34 = arith.constant 0 : index
      %c0_35 = arith.constant 0 : index
      %c0_36 = arith.constant 0 : index
      %94 = vector.load %arg5[%c0_34, %c0_35, %c0_36] : memref<1x1x256xf32, #tpu.memory_space<vmem>>, vector<1x1x256xf32>
      %95 = vector.shape_cast %94 : vector<1x1x256xf32> to vector<1x256xf32>
      %96 = vector.shape_cast %93 : vector<1x256xf32> to vector<1x1x256xf32>
      tpu.vector_store %arg5[%c0_34, %c0_35, %c0_36], %96 {strides = array<i32>} : memref<1x1x256xf32, #tpu.memory_space<vmem>>, vector<1x1x256xf32>,
    } else {
    }
    return
  }
  func.func @transform_0(%arg0: i32, %arg1: i32) -> (i32, i32, i32) {
    %c0_i32 = arith.constant 0 : i32
    %c0_i32_0 = arith.constant 0 : i32
    %c0_i32_1 = arith.constant 0 : i32
    return %arg1, %c0_i32, %c0_i32_0 : i32, i32, i32
  }
  func.func @transform_1(%arg0: i32, %arg1: i32) -> (i32, i32) {
    %c0_i32 = arith.constant 0 : i32
    %c0_i32_0 = arith.constant 0 : i32
    %c0_i32_1 = arith.constant 0 : i32
    return %c0_i32, %c0_i32_0 : i32, i32
  }
  func.func @transform_2(%arg0: i32, %arg1: i32) -> (i32, i32, i32) {
    %c0_i32 = arith.constant 0 : i32
    %c0_i32_0 = arith.constant 0 : i32
    return %arg0, %arg1, %c0_i32 : i32, i32, i32
  }
  func.func @transform_3(%arg0: i32, %arg1: i32) -> (i32, i32, i32) {
    %c0_i32 = arith.constant 0 : i32
    %c0_i32_0 = arith.constant 0 : i32
    %c0_i32_1 = arith.constant 0 : i32
    return %arg0, %c0_i32, %c0_i32_0 : i32, i32, i32
  }
}

</mosaic_0001>

<llo_original>
// kernel: tpu_custom_call.1
$region0: #{tpu_custom_call.1}
  #allocation0 [shape = 'u32[]', space=smem, size = 0x4, offset = 0x4, fixed_abs, tag = 'smem constant byte address 0x4 - core index']
  #allocation1 [shape = 'u32[144,128]{1,0:T(1,128)}', space=vmem, size = 0x12000, scoped, tag = 'internal scratch']
  #allocation2 [shape = 'f32[16,256]{1,0:T(8,128)}', space=vmem, size = 0x4000, scoped, tag = 'scratch operand']
  #allocation3 [shape = 'f32[1,1]{1,0:T(1,128)S(6)}', space=smem, size = 0x200, scoped, tag = 'scoped memory for tpu_custom_call.1']
  %s0 = inlined_call_operand.vmem [shape: f32[2,16,8], index: 0, kind: input, shape index: {}]
  %s1 = inlined_call_operand.<no memory space> [shape: f32[1,1], index: 1, kind: input, shape index: {}]
  %s2 = inlined_call_operand.hbm [shape: f32[2,16,256], index: 2, kind: input, shape index: {}]
  %s3 = inlined_call_operand.hbm [shape: f32[2,1,256], index: 3, kind: output, shape index: {}]
  %s4 = sld [smem:[#allocation0]]
  $region57: #{tpu_custom_call.1} parent=0
    _
  %s6 = ssub.s32 1, %s4
  %s7 = scalar_select 0, %s6, %s4
  %8 = sst [smem:[#allocation3]] %s1
  $region1: #{tpu_custom_call.1} parent=0
    #allocation4 [shape = 'u8[16384]{0}', space=vmem, size = 0x4000, scoped, tag = 'input window, operand 2']
    #allocation5 [shape = 's32[2]{0}', space=sflag, size = 0x8, scoped, tag = 'scoped memory for tpu_custom_call.1']
    #allocation6 [shape = 's32[2]{0}', space=sflag, size = 0x8, scoped, tag = 'scoped memory for tpu_custom_call.1']
    #allocation7 [shape = 'u8[2048]{0}', space=vmem, size = 0x800, scoped, tag = 'output window, operand 0']
    %9 = vsyncpa [#allocation5], 0
    %s10 = scalar_lea.sflag [#allocation5], 1
    %11 = vsyncpa %s10, 0
    %12 = vsyncpa [#allocation6], 0
    %s13 = scalar_lea.sflag [#allocation6], 1
    %14 = vsyncpa %s13, 0
    loop: start=0, step=1, limit=6
    $region2: #{tpu_custom_call.1} parent=1 // loop_pre_header
      _
    $region3: #{tpu_custom_call.1} parent=1 // loop_header
      %s16 = sphi 0, %s20
      %p17 = scmp.ge.s32.totalorder %s16, 6
      %s23 = sphi 0, %s35
      %s24 = sphi 0, %s31
      %s25 = sphi 0, %s23
      %s26 = sphi 0, %s24
      %s27 = sphi 0, %s25
      %s28 = sphi 0, %s26
      %s38 = sphi 0, %s40
      %s41 = sphi 0, %s38
      %s42 = sphi 0, %s41
      %s58 = sphi 0, %s42
      %s62 = sphi 0, %s62
      %s64 = sphi 0, %s62
      %s65 = sphi 0, %s64
      %s79 = sphi 0, %s65
      %s87 = sphi 0, %s89
      %s90 = sphi 0, %s87
      %s91 = sphi 0, %s90
      %s107 = sphi 0, %s91
      %s113 = sphi 0, %s115
      %s116 = sphi 0, %s113
      %s117 = sphi 0, %s116
      %s133 = sphi 0, %s117
    $region4: #{tpu_custom_call.1} parent=1 // loop_header_branch
      %19 = sbr.rel (%p17) target = $region8
    $region5: #{tpu_custom_call.1} parent=1 // loop_body
      %s21 = ssub.s32 %s16, 1
      %s22 = ssub.s32 %s16, 2
      %s29 = sadd.s32 1, %s24
      %p30 = scmp.ge.s32.totalorder %s29, 2
      %s31 = scalar_select %p30, 0, %s29
      %s32 = sadd.s32 1, %s23
      %s33 = scalar_select %p30, %s32, %s23
      %p34 = scmp.ge.s32.totalorder %s33, 2
      %s35 = scalar_select %p34, 0, %s33
      %s36 = ssub.s32 %s24, %s31
      %p37 = scmp.eq.s32.totalorder %s36, 0
      %s39 = sadd.s32 %s38, 1
      %s40 = scalar_select %p37, %s38, %s39
      %p43 = pneg %p37
      %p44 = scmp.eq.s32.totalorder %s16, 3
      %p45 = por %p43, %p44
      %p46 = scmp.ne.s32.totalorder %s38, %s41
      %p47 = scmp.eq.s32.totalorder %s16, 0
      %p48 = por %p46, %p47
      %p49 = scmp.ne.s32.totalorder %s38, %s41
      %p50 = scmp.eq.s32.totalorder %s21, 3
      %p51 = por %p49, %p50
      %p52 = scmp.ne.s32.totalorder %s41, %s42
      %p53 = scmp.eq.s32.totalorder %s21, 0
      %p54 = por %p52, %p53
      %p55 = scmp.ne.s32.totalorder %s41, %s42
      %p56 = scmp.eq.s32.totalorder %s22, 3
      %p57 = por %p55, %p56
      %p59 = scmp.ne.s32.totalorder %s42, %s58
      %p60 = scmp.eq.s32.totalorder %s22, 0
      %p61 = por %p59, %p60
      %s63 = sadd.s32 %s62, 1
      %p66 = scmp.eq.s32.totalorder %s16, 3
      %p67 = scmp.ne.s32.totalorder %s62, %s64
      %p68 = scmp.eq.s32.totalorder %s16, 0
      %p69 = por %p67, %p68
      %p70 = scmp.ne.s32.totalorder %s62, %s64
      %p71 = scmp.eq.s32.totalorder %s21, 3
      %p72 = por %p70, %p71
      %p73 = scmp.ne.s32.totalorder %s64, %s65
      %p74 = scmp.eq.s32.totalorder %s21, 0
      %p75 = por %p73, %p74
      %p76 = scmp.ne.s32.totalorder %s64, %s65
      %p77 = scmp.eq.s32.totalorder %s22, 3
      %p78 = por %p76, %p77
      %p80 = scmp.ne.s32.totalorder %s65, %s79
      %p81 = scmp.eq.s32.totalorder %s22, 0
      %p82 = por %p80, %p81
      %s83 = ssub.s32 %s23, %s35
      %s84 = ssub.s32 %s24, %s31
      %s85 = sor.u32 %s83, %s84
      %p86 = scmp.eq.s32.totalorder %s85, 0
      %s88 = sadd.s32 %s87, 1
      %s89 = scalar_select %p86, %s87, %s88
      %p92 = pneg %p86
      %p93 = scmp.eq.s32.totalorder %s16, 3
      %p94 = por %p92, %p93
      %p95 = scmp.ne.s32.totalorder %s87, %s90
      %p96 = scmp.eq.s32.totalorder %s16, 0
      %p97 = por %p95, %p96
      %p98 = scmp.ne.s32.totalorder %s87, %s90
      %p99 = scmp.eq.s32.totalorder %s21, 3
      %p100 = por %p98, %p99
      %p101 = scmp.ne.s32.totalorder %s90, %s91
      %p102 = scmp.eq.s32.totalorder %s21, 0
      %p103 = por %p101, %p102
      %p104 = scmp.ne.s32.totalorder %s90, %s91
      %p105 = scmp.eq.s32.totalorder %s22, 3
      %p106 = por %p104, %p105
      %p108 = scmp.ne.s32.totalorder %s91, %s107
      %p109 = scmp.eq.s32.totalorder %s22, 0
      %p110 = por %p108, %p109
      %s111 = ssub.s32 %s23, %s35
      %p112 = scmp.eq.s32.totalorder %s111, 0
      %s114 = sadd.s32 %s113, 1
      %s115 = scalar_select %p112, %s113, %s114
      %p118 = pneg %p112
      %p119 = scmp.eq.s32.totalorder %s16, 3
      %p120 = por %p118, %p119
      %p121 = scmp.ne.s32.totalorder %s113, %s116
      %p122 = scmp.eq.s32.totalorder %s16, 0
      %p123 = por %p121, %p122
      %p124 = scmp.ne.s32.totalorder %s113, %s116
      %p125 = scmp.eq.s32.totalorder %s21, 3
      %p126 = por %p124, %p125
      %p127 = scmp.ne.s32.totalorder %s116, %s117
      %p128 = scmp.eq.s32.totalorder %s21, 0
      %p129 = por %p127, %p128
      %p130 = scmp.ne.s32.totalorder %s116, %s117
      %p131 = scmp.eq.s32.totalorder %s22, 3
      %p132 = por %p130, %p131
      %p134 = scmp.ne.s32.totalorder %s117, %s133
      %p135 = scmp.eq.s32.totalorder %s22, 0
      %p136 = por %p134, %p135
      %p137 = scmp.le.s32.totalorder 1, %s16
      %p138 = scmp.lt.s32.totalorder %s16, 5
      %p139 = pnand %p137, %p138
      %p140 = pneg %p139
      // Predicated region
      $region9: #{tpu_custom_call.1} parent=5 // pred_check
        _
      $region10: #{tpu_custom_call.1} parent=5 // pred_check_branch
        %142 = sbr.rel (%p139) target = $region12
      $region11: #{tpu_custom_call.1} parent=5 // pred_region
        %s143 = ssub.s32 %s16, 1
        // Predicated region
        $region13: #{tpu_custom_call.1} parent=11 // pred_check
          %p144 = pneg %p75
        $region14: #{tpu_custom_call.1} parent=11 // pred_check_branch
          %146 = sbr.rel (%p144) target = $region16
        $region15: #{tpu_custom_call.1} parent=11 // pred_region
          _
        $region16: #{tpu_custom_call.1} parent=11 // pred_fallthru
          _
      $region12: #{tpu_custom_call.1} parent=5 // pred_fallthru
        _
      %p147 = scmp.lt.s32.totalorder %s16, 4
      // Predicated region
      $region17: #{tpu_custom_call.1} parent=5 // pred_check
        %p148 = pneg %p147
      $region18: #{tpu_custom_call.1} parent=5 // pred_check_branch
        %150 = sbr.rel (%p148) target = $region20
      $region19: #{tpu_custom_call.1} parent=5 // pred_region
        // Predicated region
        $region21: #{tpu_custom_call.1} parent=19 // pred_check
          %p151 = pneg %p48
        $region22: #{tpu_custom_call.1} parent=19 // pred_check_branch
          %153 = sbr.rel (%p151) target = $region24
        $region23: #{tpu_custom_call.1} parent=19 // pred_region
          %p154 = scmp.lt.s32.totalorder %s24, 1
          %s155 = scalar_select %p154, %s24, 1
          %s156 = smul.addr %s155, 2
          %s157 = smul.addr %s156, 8
          %s158 = scalar_lea.vmem %s0, %s157
        $region24: #{tpu_custom_call.1} parent=19 // pred_fallthru
          _
        // Predicated region
        $region25: #{tpu_custom_call.1} parent=19 // pred_check
          %p159 = pneg %p97
        $region26: #{tpu_custom_call.1} parent=19 // pred_check_branch
          %161 = sbr.rel (%p159) target = $region28
        $region27: #{tpu_custom_call.1} parent=19 // pred_region
          %s162 = sand.u32 %s87, 1
          %s163 = scalar_lea.sflag [#allocation5], %s162
          %s164 = sand.u32 %s87, 1
          %s165 = smul.addr %s164, 16
          %s166 = scalar_lea.vmem [#allocation4], %s165
          %s168 = ssub.s32 256, 256
          %169 = vsyncadd %s163, %s168
          %s170 = smul.addr %s24, 2
          %s171 = smul.addr %s23, 4
          %s172 = sadd.s32 %s170, %s171
          %s173 = smul.addr %s172, 128
          %s174 = scalar_lea.hbm %s2, %s173
          %s176 = sshll.u32 %s166, 4
          %s177 = int_to_ptr.vmem [resolvable:$true] %s176
          %179 = dma.hbm_to_vmem [thread:$0]  %s174, 256, %s177, %s163
        $region28: #{tpu_custom_call.1} parent=19 // pred_fallthru
          _
      $region20: #{tpu_custom_call.1} parent=5 // pred_fallthru
        _
      %p180 = scmp.le.s32.totalorder 1, %s16
      %p181 = scmp.lt.s32.totalorder %s16, 5
      %p182 = pnand %p180, %p181
      %p183 = pneg %p182
      // Predicated region
      $region29: #{tpu_custom_call.1} parent=5 // pred_check
        _
      $region30: #{tpu_custom_call.1} parent=5 // pred_check_branch
        %185 = sbr.rel (%p182) target = $region32
      $region31: #{tpu_custom_call.1} parent=5 // pred_region
        %s186 = ssub.s32 %s16, 1
        %s187 = sand.u32 %s90, 1
        %s188 = scalar_lea.sflag [#allocation5], %s187
        %s189 = sand.u32 %s90, 1
        %s190 = smul.addr %s189, 16
        %s191 = scalar_lea.vmem [#allocation4], %s190
        // Predicated region
        $region33: #{tpu_custom_call.1} parent=31 // pred_check
          %p192 = pneg %p103
        $region34: #{tpu_custom_call.1} parent=31 // pred_check_branch
          %194 = sbr.rel (%p192) target = $region36
        $region35: #{tpu_custom_call.1} parent=31 // pred_region
          %195 = dma.done %s188, 256
        $region36: #{tpu_custom_call.1} parent=31 // pred_fallthru
          _
        %p196 = scmp.lt.s32.totalorder %s26, 1
        %s197 = scalar_select %p196, %s26, 1
        %s198 = smul.addr %s197, 2
        %s199 = smul.addr %s198, 8
        %s200 = scalar_lea.vmem %s0, %s199
        %p201 = pneg %p54
        %p202 = pneg %p51
        %p203 = pneg %p75
        %p204 = pneg %p72
        %s205 = sand.u32 %s90, 1
        %s206 = scalar_lea.sflag [#allocation5], %s205
        %s207 = sand.u32 %s90, 1
        %s208 = smul.addr %s207, 16
        %s209 = scalar_lea.vmem [#allocation4], %s208
        %p210 = pneg %p103
        %p211 = pneg %p100
        %p212 = pneg %p129
        %p213 = pneg %p126
        %s214 = sand.u32 %s116, 1
        %s215 = scalar_lea.sflag [#allocation6], %s214
        %s216 = sand.u32 %s116, 1
        %s217 = smul.addr %s216, 2
        %s218 = scalar_lea.vmem [#allocation7], %s217
        %p219 = scmp.lt.s32.totalorder %s26, 1
        %s220 = scalar_select %p219, %s26, 1
        %s221 = smul.addr %s220, 2
        %s222 = smul.addr %s221, 8
        %s223 = scalar_lea.vmem %s0, %s222
        %p224 = scmp.eq.s32.totalorder %s26, 0
        // Predicated region
        $region37: #{tpu_custom_call.1} parent=31 // pred_check
          %p225 = pneg %p224
        $region38: #{tpu_custom_call.1} parent=31 // pred_check_branch
          %227 = sbr.rel (%p225) target = $region40
        $region39: #{tpu_custom_call.1} parent=31 // pred_region
          %228 = vst [vmem:[#allocation2] sm:$0xff] 0.0
          %229 = vst [vmem:[#allocation2 + $0x8] sm:$0xff] 0.0
          %230 = vst [vmem:[#allocation2 + $0x10] sm:$0xff] 0.0
          %231 = vst [vmem:[#allocation2 + $0x18] sm:$0xff] 0.0
        $region40: #{tpu_custom_call.1} parent=31 // pred_fallthru
          _
        %v232 = vld [vmem:[#allocation2] sm:$0xff]
        %v233 = vld [vmem:[#allocation2 + $0x8] sm:$0xff]
        %v234 = vld [vmem:[#allocation2 + $0x10] sm:$0xff]
        %v235 = vld [vmem:[#allocation2 + $0x18] sm:$0xff]
        %v236 = vld [vmem:[%s223] sm:$0xff]
        %v237 = vld [vmem:[%s223 + $0x8] sm:$0xff]
        %v238 = vld [vmem:[%s191] sm:$0xff]
        %v239 = vld [vmem:[%s191 + $0x8] sm:$0xff]
        %vm240 = vcmask 64512
        %v242 = vsel %vm240, %v236, 0
        %v245 = vsel %vm240, %v237, 0
        %247 = vmatprep.subr.mxu0 0.0
        %248 = vmatpush1.msra.mxu0 0.0
        %249 = vmatprep.subr.mxu0 0.0
        %250 = vmatpush1.msra.mxu0 0.0
        %251 = vmatprep.subr.mxu0 0.0
        %252 = vmatpush1.msra.mxu0 0.0
        %253 = vmatprep.subr.mxu0 0.0
        %254 = vmatpush1.msra.mxu0 0.0
        %255 = vmatprep.subr.mxu0 0.0
        %256 = vmatpush1.msra.mxu0 0.0
        %257 = vmatprep.subr.mxu0 0.0
        %258 = vmatpush1.msra.mxu0 0.0
        %259 = vmatprep.subr.mxu0 0.0
        %260 = vmatpush1.msra.mxu0 0.0
        %261 = vmatprep.subr.mxu0 0.0
        %262 = vmatpush1.msra.mxu0 0.0
        %263 = vmatprep.subr.mxu0 0.0
        %264 = vmatpush1.msra.mxu0 0.0
        %265 = vmatprep.subr.mxu0 0.0
        %266 = vmatpush1.msra.mxu0 0.0
        %267 = vmatprep.subr.mxu0 0.0
        %268 = vmatpush1.msra.mxu0 0.0
        %269 = vmatprep.subr.mxu0 0.0
        %270 = vmatpush1.msra.mxu0 0.0
        %271 = vmatprep.subr.mxu0 0.0
        %272 = vmatpush1.msra.mxu0 0.0
        %273 = vmatprep.subr.mxu0 0.0
        %274 = vmatpush1.msra.mxu0 0.0
        %275 = vmatprep.subr.mxu0 0.0
        %276 = vmatpush1.msra.mxu0 0.0
        %277 = vmatprep.subr.mxu0 %v239
        %278 = vmatpush1.msra.mxu0 %v238
        %279 = vmatprep.subr.mxu0 0.0
        %280 = vmatpush2.msra.mxu0 0.0
        %281 = vmatprep.subr.mxu0 0.0
        %282 = vmatpush2.msra.mxu0 0.0
        %283 = vmatprep.subr.mxu0 0.0
        %284 = vmatpush2.msra.mxu0 0.0
        %285 = vmatprep.subr.mxu0 0.0
        %286 = vmatpush2.msra.mxu0 0.0
        %287 = vmatprep.subr.mxu0 0.0
        %288 = vmatpush2.msra.mxu0 0.0
        %289 = vmatprep.subr.mxu0 0.0
        %290 = vmatpush2.msra.mxu0 0.0
        %291 = vmatprep.subr.mxu0 0.0
        %292 = vmatpush2.msra.mxu0 0.0
        %293 = vmatprep.subr.mxu0 0.0
        %294 = vmatpush2.msra.mxu0 0.0
        %295 = vmatprep.subr.mxu0 0.0
        %296 = vmatpush2.msra.mxu0 0.0
        %297 = vmatprep.subr.mxu0 0.0
        %298 = vmatpush2.msra.mxu0 0.0
        %299 = vmatprep.subr.mxu0 0.0
        %300 = vmatpush2.msra.mxu0 0.0
        %301 = vmatprep.subr.mxu0 0.0
        %302 = vmatpush2.msra.mxu0 0.0
        %303 = vmatprep.subr.mxu0 0.0
        %304 = vmatpush2.msra.mxu0 0.0
        %305 = vmatprep.subr.mxu0 0.0
        %306 = vmatpush2.msra.mxu0 0.0
        %307 = vmatprep.subr.mxu0 0.0
        %308 = vmatpush2.msra.mxu0 0.0
        %309 = vmatprep.subr.mxu0 0.0
        %310 = vmatpush2.msra.mxu0 0.0
        %311 = vmatprep.mubr.f32.mxu0 0.0
        %312 = vmatmul.mubr.f32.gmra.mxu0 %v242
        %v313 = vpop.f32.mrf.mxu0
        %v314 = vadd.f32 0.0, %v313
        %v315 = vpop.f32.mrf.mxu0
        %v316 = vadd.f32 0.0, %v315
        %317 = vmatprep.mubr.f32.mxu0 0.0
        %318 = vmatmul.mubr.f32.gmra.mxu0 %v245
        %v319 = vpop.f32.mrf.mxu0
        %v320 = vadd.f32 0.0, %v319
        %v321 = vpop.f32.mrf.mxu0
        %v322 = vadd.f32 0.0, %v321
        %323 = vdwg.mxu0
        %v324 = vadd.f32 %v232, %v314
        %v325 = vadd.f32 %v233, %v316
        %v326 = vadd.f32 %v234, %v320
        %v327 = vadd.f32 %v235, %v322
        %328 = vst [vmem:[#allocation2] sm:$0xff] %v324
        %329 = vst [vmem:[#allocation2 + $0x8] sm:$0xff] %v325
        %330 = vst [vmem:[#allocation2 + $0x10] sm:$0xff] %v326
        %331 = vst [vmem:[#allocation2 + $0x18] sm:$0xff] %v327
        %p332 = scmp.eq.s32.totalorder %s26, 1
        // Predicated region
        $region41: #{tpu_custom_call.1} parent=31 // pred_check
          %p333 = pneg %p332
        $region42: #{tpu_custom_call.1} parent=31 // pred_check_branch
          %335 = sbr.rel (%p333) target = $region44
        $region43: #{tpu_custom_call.1} parent=31 // pred_region
          %v336 = vld [vmem:[#allocation2] sm:$0xff]
          %v337 = vld [vmem:[#allocation2 + $0x8] sm:$0xff]
          %v338 = vld [vmem:[#allocation2 + $0x10] sm:$0xff]
          %v339 = vld [vmem:[#allocation2 + $0x18] sm:$0xff]
          %v340 = vlaneseq
          %v341 = vand.u32 %v340, 127
          %v342 = vadd.s32 %v341, 128
          %v343 = vcvt.s32.f32 %v341
          %v344 = vcvt.s32.f32 %v342
          %v345 = vmul.f32 %v343, 0.0625
          %v346 = vmul.f32 %v344, 0.0625
          %v347 = vcvt.f32.s32.to.zero.pseudo %v345
          %v348 = vcvt.f32.s32.to.zero.pseudo %v346
          %v349 = vmul.u32 %v347, 16
          %v350 = vmul.u32 %v348, 16
          %v351 = vsub.s32 %v341, %v349
          %v352 = vsub.s32 %v342, %v350
          %vm353 = vcmp.lt.s32.totalorder %v351, 0
          %vm354 = vcmp.lt.s32.totalorder %v352, 0
          %v355 = vadd.s32 %v351, 16
          %v356 = vadd.s32 %v352, 16
          %v357 = vsel %vm353, %v355, %v351
          %v358 = vsel %vm354, %v356, %v352
          %vm359 = vcmp.ge.s32.totalorder %v357, 16
          %vm360 = vcmp.ge.s32.totalorder %v358, 16
          %v361 = vsub.s32 %v357, 16
          %v362 = vsub.s32 %v358, 16
          %v363 = vsel %vm359, %v361, %v357
          %v364 = vsel %vm360, %v362, %v358
          %vm365 = vcmp.ge.s32.totalorder %v341, 16
          %vm366 = vcmp.ge.s32.totalorder %v342, 16
          %vm367 = vcmp.lt.s32.totalorder %v341, 240
          %vm368 = vcmp.lt.s32.totalorder %v342, 240
          %vm369 = vcmp.ge.s32.totalorder %v363, 1
          %vm370 = vcmp.ge.s32.totalorder %v364, 1
          %vm371 = vcmp.le.s32.totalorder %v363, 14
          %vm372 = vcmp.le.s32.totalorder %v364, 14
          %s373 = sld [smem:[#allocation3]]
          %v374 = vstv %s373
          %375 = vrot.lane.b32.xlu0 %v336, 17
          %v376 = vpop.permute.xlu0 %375
          %377 = vrot.lane.b32.xlu0 %v337, 17
          %v378 = vpop.permute.xlu0 %377
          %vm379 = vcmp.lt.s32.totalorder %v341, 17
          %v380 = vsel %vm379, %v376, %v378
          %v381 = vsel %vm379, %v378, %v376
          %vm382 = vmand %vm365, %vm369
          %vm383 = vmand %vm366, %vm370
          %v384 = vsel %vm382, %v381, 0.0
          %v385 = vsel %vm383, %v380, 0.0
          %v386 = vadd.f32 %v374, %v384
          %v387 = vadd.f32 %v374, %v385
          %v390 = vrot.slane %v336, 1
          %v391 = vrot.slane %v337, 1
          %394 = vrot.lane.b32.xlu0 %v390, 16
          %v395 = vpop.permute.xlu0 %394
          %396 = vrot.lane.b32.xlu0 %v391, 16
          %v397 = vpop.permute.xlu0 %396
          %vm398 = vcmp.lt.s32.totalorder %v341, 16
          %v399 = vsel %vm398, %v395, %v397
          %v400 = vsel %vm398, %v397, %v395
          %v401 = vsel %vm365, %v400, 0.0
          %v402 = vsel %vm366, %v399, 0.0
          %v403 = vadd.f32 %v386, %v401
          %v404 = vadd.f32 %v387, %v402
          %v405 = vrot.slane %v336, 2
          %v406 = vrot.slane %v337, 2
          %409 = vrot.lane.b32.xlu0 %v405, 15
          %v410 = vpop.permute.xlu0 %409
          %411 = vrot.lane.b32.xlu0 %v406, 15
          %v412 = vpop.permute.xlu0 %411
          %vm413 = vcmp.lt.s32.totalorder %v341, 15
          %v414 = vsel %vm413, %v410, %v412
          %v415 = vsel %vm413, %v412, %v410
          %vm416 = vmand %vm365, %vm371
          %vm417 = vmand %vm366, %vm372
          %v418 = vsel %vm416, %v415, 0.0
          %v419 = vsel %vm417, %v414, 0.0
          %v420 = vadd.f32 %v403, %v418
          %v421 = vadd.f32 %v404, %v419
          %v422 = vrot.slane %v336, 3
          %v423 = vrot.slane %v337, 3
          %426 = vrot.lane.b32.xlu0 %v422, 1
          %v427 = vpop.permute.xlu0 %426
          %428 = vrot.lane.b32.xlu0 %v423, 1
          %v429 = vpop.permute.xlu0 %428
          %vm430 = vcmp.lt.s32.totalorder %v341, 1
          %v431 = vsel %vm430, %v427, %v429
          %v432 = vsel %vm430, %v429, %v427
          %v433 = vsel %vm369, %v432, 0.0
          %v434 = vsel %vm370, %v431, 0.0
          %v435 = vadd.f32 %v420, %v433
          %v436 = vadd.f32 %v421, %v434
          %v437 = vrot.slane %v336, 4
          %v438 = vrot.slane %v337, 4
          %v441 = vadd.f32 %v435, %v437
          %v442 = vadd.f32 %v436, %v438
          %v443 = vrot.slane %v336, 5
          %v444 = vrot.slane %v337, 5
          %447 = vrot.lane.b32.xlu0 %v443, 127
          %v448 = vpop.permute.xlu0 %447
          %449 = vrot.lane.b32.xlu0 %v444, 127
          %v450 = vpop.permute.xlu0 %449
          %vm451 = vcmp.lt.s32.totalorder %v341, 127
          %v452 = vsel %vm451, %v448, %v450
          %v453 = vsel %vm451, %v450, %v448
          %v454 = vsel %vm371, %v452, 0.0
          %v455 = vsel %vm372, %v453, 0.0
          %v456 = vadd.f32 %v441, %v454
          %v457 = vadd.f32 %v442, %v455
          %v458 = vrot.slane %v336, 6
          %v459 = vrot.slane %v337, 6
          %462 = vrot.lane.b32.xlu0 %v458, 113
          %v463 = vpop.permute.xlu0 %462
          %464 = vrot.lane.b32.xlu0 %v459, 113
          %v465 = vpop.permute.xlu0 %464
          %vm466 = vcmp.lt.s32.totalorder %v341, 113
          %v467 = vsel %vm466, %v463, %v465
          %v468 = vsel %vm466, %v465, %v463
          %vm469 = vmand %vm367, %vm369
          %vm470 = vmand %vm368, %vm370
          %v471 = vsel %vm469, %v467, 0.0
          %v472 = vsel %vm470, %v468, 0.0
          %v473 = vadd.f32 %v456, %v471
          %v474 = vadd.f32 %v457, %v472
          %v475 = vrot.slane %v336, 7
          %v476 = vrot.slane %v337, 7
          %479 = vrot.lane.b32.xlu0 %v475, 112
          %v480 = vpop.permute.xlu0 %479
          %481 = vrot.lane.b32.xlu0 %v476, 112
          %v482 = vpop.permute.xlu0 %481
          %vm483 = vcmp.lt.s32.totalorder %v341, 112
          %v484 = vsel %vm483, %v480, %v482
          %v485 = vsel %vm483, %v482, %v480
          %v486 = vsel %vm367, %v484, 0.0
          %v487 = vsel %vm368, %v485, 0.0
          %v488 = vadd.f32 %v473, %v486
          %v489 = vadd.f32 %v474, %v487
          %490 = vrot.lane.b32.xlu0 %v338, 111
          %v491 = vpop.permute.xlu0 %490
          %492 = vrot.lane.b32.xlu0 %v339, 111
          %v493 = vpop.permute.xlu0 %492
          %vm494 = vcmp.lt.s32.totalorder %v341, 111
          %v495 = vsel %vm494, %v491, %v493
          %v496 = vsel %vm494, %v493, %v491
          %vm497 = vmand %vm367, %vm371
          %vm498 = vmand %vm368, %vm372
          %v499 = vsel %vm497, %v495, 0.0
          %v500 = vsel %vm498, %v496, 0.0
          %v501 = vadd.f32 %v488, %v499
          %v502 = vadd.f32 %v489, %v500
          %v503 = vxor.u32 %v501, 2147483648
          %v504 = vxor.u32 %v502, 2147483648
          %v505 = vmul.f32 %v503, 1.442695
          %v506 = vpow.pop %v505
          %v507 = vmul.f32 %v504, 1.442695
          %v508 = vpow.pop %v507
          %v509 = vadd.f32 %v506, 1.0
          %v510 = vadd.f32 %v508, 1.0
          %v511 = vrcp.pop %v509
          %v512 = vmul.f32 1.0, %v511
          %v513 = vrcp.pop %v510
          %v514 = vmul.f32 1.0, %v513
          %v517 = vcombine.low %v512, %v514
          %v519 = vunpack.c.l.s4 1966171168
          %v520 = vunpack.c.0.s8 %v519
          %v521 = vlaneseq
          %v522 = vshrl.u32 %v521, 7
          %v523 = vsub.s32 %v520, %v522
          %v524 = vrot.slane %v517, %v523
          %v526 = vunpack.c.l.s4 1966171168
          %v527 = vunpack.c.0.s8 %v526
          %v528 = vlaneseq
          %v529 = vshrl.u32 %v528, 7
          %v530 = vsub.s32 %v527, %v529
          %v531 = vrot.slane %v524, %v530
          %v533 = vlaneseq
          %vm534 = vcmp.ge.s32.totalorder %v533, 0
          %vm535 = vcmp.lt.s32.totalorder %v533, 256
          %vm536 = vmand %vm534, %vm535
          %537 = vst.msk [vmem:[%s218] sm:$0x3] %vm536, %v531
        $region44: #{tpu_custom_call.1} parent=31 // pred_fallthru
          _
        %s538 = sand.u32 %s116, 1
        %s539 = scalar_lea.sflag [#allocation6], %s538
        %s540 = sand.u32 %s116, 1
        %s541 = smul.addr %s540, 2
        %s542 = scalar_lea.vmem [#allocation7], %s541
        // Predicated region
        $region45: #{tpu_custom_call.1} parent=31 // pred_check
          %p543 = pneg %p126
        $region46: #{tpu_custom_call.1} parent=31 // pred_check_branch
          %545 = sbr.rel (%p543) target = $region48
        $region47: #{tpu_custom_call.1} parent=31 // pred_region
          %s547 = ssub.s32 32, 32
          %548 = vsyncadd %s539, %s547
          %s549 = smul.addr %s25, 2
          %s550 = smul.addr %s549, 16
          %s551 = scalar_lea.hbm %s3, %s550
          %s553 = sshll.u32 %s542, 4
          %s554 = int_to_ptr.vmem [resolvable:$true] %s553
          %556 = dma.vmem_to_hbm [thread:$0]  %s554, 32, %s551, %s539
        $region48: #{tpu_custom_call.1} parent=31 // pred_fallthru
          _
      $region32: #{tpu_custom_call.1} parent=5 // pred_fallthru
        _
      %p557 = scmp.le.s32.totalorder 2, %s16
      // Predicated region
      $region49: #{tpu_custom_call.1} parent=5 // pred_check
        %p558 = pneg %p557
      $region50: #{tpu_custom_call.1} parent=5 // pred_check_branch
        %560 = sbr.rel (%p558) target = $region52
      $region51: #{tpu_custom_call.1} parent=5 // pred_region
        %s561 = ssub.s32 %s16, 2
        // Predicated region
        $region53: #{tpu_custom_call.1} parent=51 // pred_check
          %p562 = pneg %p132
        $region54: #{tpu_custom_call.1} parent=51 // pred_check_branch
          %564 = sbr.rel (%p562) target = $region56
        $region55: #{tpu_custom_call.1} parent=51 // pred_region
          %s565 = sand.u32 %s117, 1
          %s566 = scalar_lea.sflag [#allocation6], %s565
          %s567 = sand.u32 %s117, 1
          %s568 = smul.addr %s567, 2
          %s569 = scalar_lea.vmem [#allocation7], %s568
          %570 = dma.done %s566, 32
        $region56: #{tpu_custom_call.1} parent=51 // pred_fallthru
          _
      $region52: #{tpu_custom_call.1} parent=5 // pred_fallthru
        _
    $region6: #{tpu_custom_call.1} parent=1 // loop_footer
      %s20 = sadd.s32 1, %s16
    $region7: #{tpu_custom_call.1} parent=1 // loop_footer_branch
      %15 = sbr.rel target = $region3
    $region8: #{tpu_custom_call.1} parent=1 // loop_exit
      _
    %571 = vsyncpa [#allocation5], 1
    %s572 = scalar_lea.sflag [#allocation5], 1
    %573 = vsyncpa %s572, 1
    %574 = vsyncpa [#allocation6], 1
    %s575 = scalar_lea.sflag [#allocation6], 1
    %576 = vsyncpa %s575, 1

</llo_original>
